<compile_context>
chip_gen: v5e
topology: v5e:2x2
jax: 0.10.0
libtpu: 0.0.40
codegen_flags: <defaults>
</compile_context>

<pallas_src>
import jax
import jax.numpy as jnp
from jax.experimental import pallas as pl
from jax.experimental.pallas import tpu as pltpu

_MIB = 1024 * 1024


def _round_up(x, m):
    return ((x + m - 1) // m) * m


# ---------------------------------------------------------------------------
# Kernels
# ---------------------------------------------------------------------------
def _sentnn_kernel_feat(emb_ref, feat_ref, w_emb_ref, w_feat_ref, b_ref, o_ref):
    # emb_ref:   (TM, E)  native dtype in VMEM (streamed)
    # feat_ref:  (TM, F)  native dtype in VMEM (streamed)
    # w_emb_ref: (E, 1)   emb dtype in VMEM (resident across grid)
    # w_feat_ref:(F, 1)   feat dtype in VMEM (resident across grid)
    # b_ref:     (1,)     f32 in SMEM
    # o_ref:     (TM, 1)  f32 in VMEM
    # Dropout is identity in eval mode (nn.Dropout only scales during training).
    acc = jnp.dot(emb_ref[...], w_emb_ref[...],
                  preferred_element_type=jnp.float32)
    acc = acc + jnp.dot(feat_ref[...], w_feat_ref[...],
                        preferred_element_type=jnp.float32)
    o_ref[...] = acc + b_ref[0]


def _sentnn_kernel_nofeat(emb_ref, w_emb_ref, b_ref, o_ref):
    acc = jnp.dot(emb_ref[...], w_emb_ref[...],
                  preferred_element_type=jnp.float32)
    o_ref[...] = acc + b_ref[0]


# ---------------------------------------------------------------------------
# VMEM budgeting (generation-aware)
# ---------------------------------------------------------------------------
def _vmem_capacity_bytes():
    """Physical VMEM per TensorCore; conservative fallback if query fails."""
    try:
        cap = getattr(pltpu.get_tpu_info(), "vmem_capacity_bytes", None)
        if cap:
            return int(cap)
    except Exception:
        pass
    return 64 * _MIB  # conservative (v7x-sized) fallback


def _sublane_pack(itemsize):
    # rows per packed sublane group: f32 -> 8, bf16 -> 16, int8/fp8 -> 32
    return {4: 8, 2: 16, 1: 32}.get(int(itemsize), 8)


def _footprint_bytes(tm, e, f, emb_isz, feat_isz):
    """Live VMEM for a given row tile, counting lane padding + double buffers."""
    total = 2 * tm * _round_up(e, 128) * emb_isz            # embeddings stream
    if f > 0:
        total += 2 * tm * _round_up(f, 128) * feat_isz      # features stream
    total += 2 * tm * 128 * 4                                # (tm,1) f32 output, lane-padded
    total += 2 * _round_up(e, 8) * 128 * emb_isz             # resident w_emb (2 bufs, safe)
    if f > 0:
        total += 2 * _round_up(f, 8) * 128 * feat_isz        # resident w_feat
    return total


def _pick_tm(n, e, f, emb_isz, feat_isz, budget_bytes):
    """Largest row tile that fits the VMEM budget, with enough grid steps to
    keep both v7x TensorCores busy and the DMA pipeline double-buffered."""
    pack = _sublane_pack(emb_isz)
    if n <= pack:
        return max(int(n), 1)
    n_pad = _round_up(n, pack)

    # Per-row streamed bytes (double-buffered), counting lane padding of the
    # narrow feature/output tiles (a (tm, F<=128) f32 block costs tm*128*4 B).
    per_row = 2 * _round_up(e, 128) * emb_isz + 2 * 128 * 4
    if f > 0:
        per_row += 2 * _round_up(f, 128) * feat_isz
    resident = 2 * _round_up(e, 8) * 128 * emb_isz
    if f > 0:
        resident += 2 * _round_up(f, 8) * 128 * feat_isz

    tm = (budget_bytes - resident) // max(per_row, 1)

    # >= ~8 grid steps (>= 4 per TensorCore on v7x; >= pipelining depth on 1-TC chips).
    min_steps = 8
    tm_steps = _round_up(pl.cdiv(n, min_steps), pack)
    tm = min(int(tm), 8192, tm_steps, n_pad)

    # Round to a sublane-pack (ideally 128) multiple.
    if tm >= 128:
        tm = (tm // 128) * 128
    else:
        tm = (tm // pack) * pack
    tm = max(tm, pack)
    return min(tm, n_pad)


# ---------------------------------------------------------------------------
# Wrapper
# ---------------------------------------------------------------------------
def sentnn_forward(embeddings, weight, bias, sent_level_features=None, *, tm=None):
    """JAX/Pallas equivalent of SentNN.forward (eval mode).

    embeddings:          (N, E) float32 or bfloat16
    weight:              (1, D_total) float32   (PyTorch nn.Linear layout)
    bias:                (1,) float32
    sent_level_features: (N, F) or None
    returns:             (N,) float32
    """
    n, e = embeddings.shape
    has_feat = (sent_level_features is not None
                and sent_level_features.shape[-1] != 0)
    f = sent_level_features.shape[-1] if has_feat else 0
    d_total = e + f

    # Split dense weight and match it to the input dtypes (bf16 stays bf16 on
    # the MXU; accumulation is still f32 via preferred_element_type).
    w = weight.reshape(d_total, 1)
    w_emb = w[:e].astype(embeddings.dtype)
    w_feat = (w[e:].astype(sent_level_features.dtype) if has_feat else None)
    b = bias.astype(jnp.float32).reshape(1)               # (1,) scalar in SMEM

    emb_isz = jnp.dtype(embeddings.dtype).itemsize
    feat_isz = (jnp.dtype(sent_level_features.dtype).itemsize if has_feat else 4)

    cap = _vmem_capacity_bytes()
    # ~75% of physical per-core VMEM, capped: ~48 MiB on v7x (64 MiB/core),
    # 96 MiB on v5e/v6e (128 MiB).
    budget = min(cap * 3 // 4, 96 * _MIB)
    if tm is None:
        tm = _pick_tm(n, e, f, emb_isz, feat_isz, budget)

    footprint = _footprint_bytes(tm, e, f, emb_isz, feat_isz)
    vmem_limit = int(min(max(footprint + 8 * _MIB, 32 * _MIB), cap * 7 // 8))

    grid = (pl.cdiv(n, tm),)
    out_shape = jax.ShapeDtypeStruct((n, 1), jnp.float32)
    compiler_params = pltpu.CompilerParams(
        dimension_semantics=("parallel",),
        vmem_limit_bytes=vmem_limit,
    )

    if has_feat:
        out = pl.pallas_call(
            _sentnn_kernel_feat,
            out_shape=out_shape,
            grid=grid,
            in_specs=[
                pl.BlockSpec((tm, e), lambda i: (i, 0)),        # embeddings tile
                pl.BlockSpec((tm, f), lambda i: (i, 0)),        # features tile
                pl.BlockSpec((e, 1), lambda i: (0, 0)),         # w_emb (resident)
                pl.BlockSpec((f, 1), lambda i: (0, 0)),         # w_feat (resident)
                pl.BlockSpec(memory_space=pltpu.SMEM),          # bias scalar
            ],
            out_specs=pl.BlockSpec((tm, 1), lambda i: (i, 0)),
            compiler_params=compiler_params,
        )(embeddings, sent_level_features, w_emb, w_feat, b)
    else:
        out = pl.pallas_call(
            _sentnn_kernel_nofeat,
            out_shape=out_shape,
            grid=grid,
            in_specs=[
                pl.BlockSpec((tm, e), lambda i: (i, 0)),
                pl.BlockSpec((e, 1), lambda i: (0, 0)),
                pl.BlockSpec(memory_space=pltpu.SMEM),
            ],
            out_specs=pl.BlockSpec((tm, 1), lambda i: (i, 0)),
            compiler_params=compiler_params,
        )(embeddings, w_emb, b)

    return jnp.squeeze(out, axis=1)                         # (N,)


if __name__ == "__main__":
    # Small, deterministic example shapes consistent with the module.
    N = 16                # batch (number of sentences)
    EMB_DIM = 32          # embeddings_dim (small stand-in for 768)
    FEAT_DIM = 8          # sentence_level_feature_dim
    D_TOTAL = EMB_DIM + FEAT_DIM

    key = jax.random.PRNGKey(0)
    k_emb, k_feat, k_w, k_b = jax.random.split(key, 4)

    embeddings = jax.random.normal(k_emb, (N, EMB_DIM), dtype=jnp.float32)
    sent_feats = jax.random.normal(k_feat, (N, FEAT_DIM), dtype=jnp.float32)

    # Deterministic parameter init matching nn.Linear(D_TOTAL, 1) shapes.
    bound = 1.0 / (D_TOTAL ** 0.5)
    weight = jax.random.uniform(
        k_w, (1, D_TOTAL), minval=-bound, maxval=bound, dtype=jnp.float32)
    bias = jax.random.uniform(
        k_b, (1,), minval=-bound, maxval=bound, dtype=jnp.float32)

    # --- f32, with sentence-level features (fused "concat" path) ---
    out = sentnn_forward(embeddings, weight, bias, sent_feats)
    out = jax.block_until_ready(out)
    x_ref = jnp.concatenate((embeddings, sent_feats), axis=1)
    ref = jnp.squeeze(x_ref @ weight.T + bias, axis=1)
    assert out.shape == (N,)
    assert jnp.allclose(out, ref, atol=1e-5, rtol=1e-5)

    # --- f32, without sentence-level features ---
    w_emb_only = weight[:, :EMB_DIM]
    out2 = sentnn_forward(embeddings, w_emb_only, bias, None)
    out2 = jax.block_until_ready(out2)
    ref2 = jnp.squeeze(embeddings @ w_emb_only.T + bias, axis=1)
    assert out2.shape == (N,)
    assert jnp.allclose(out2, ref2, atol=1e-5, rtol=1e-5)

    # --- bf16 embeddings path (weights matched to bf16 on the MXU) ---
    emb_bf16 = embeddings.astype(jnp.bfloat16)
    out3 = sentnn_forward(emb_bf16, weight, bias, sent_feats)
    out3 = jax.block_until_ready(out3)
    w_bf = weight.reshape(D_TOTAL, 1)
    w_e_bf = w_bf[:EMB_DIM].astype(jnp.bfloat16).astype(jnp.float32)
    w_f = w_bf[EMB_DIM:]
    ref3 = jnp.squeeze(
        emb_bf16.astype(jnp.float32) @ w_e_bf + sent_feats @ w_f + bias, axis=1)
    assert out3.shape == (N,)
    assert jnp.allclose(out3, ref3, atol=1e-2, rtol=1e-2)

    print("KERNEL_OK")
</pallas_src>

<mosaic_0001>
module attributes {stable_mosaic.version = 11 : i64} {
  func.func @_sentnn_kernel_feat(%arg0: i32, %arg1: memref<8x32xf32, #tpu.memory_space<vmem>>, %arg2: memref<8x8xf32, #tpu.memory_space<vmem>>, %arg3: memref<32x1xf32, #tpu.memory_space<vmem>>, %arg4: memref<8x1xf32, #tpu.memory_space<vmem>>, %arg5: memref<1xf32, #tpu.memory_space<smem>>, %arg6: memref<8x1xf32, #tpu.memory_space<vmem>>) attributes {dimension_semantics = [#tpu.dimension_semantics<parallel>], iteration_bounds = array<i64: 2>, scalar_prefetch = 0 : i64, scratch_operands = 0 : i64, tpu.core_type = #tpu.core_type<tc>, window_params = [{transform_indices = @transform_0, window_bounds = array<i64: 8, 32>}, {transform_indices = @transform_1, window_bounds = array<i64: 8, 8>}, {pipeline_mode = #tpu.pipeline_mode<synchronous>, transform_indices = @transform_2, window_bounds = array<i64: 32, 1>}, {pipeline_mode = #tpu.pipeline_mode<synchronous>, transform_indices = @transform_3, window_bounds = array<i64: 8, 1>}, {transform_indices = @transform_4, window_bounds = array<i64: 1>}, {transform_indices = @transform_5, window_bounds = array<i64: 8, 1>}]} {
    %c0 = arith.constant 0 : index
    %c0_0 = arith.constant 0 : index
    %0 = vector.load %arg1[%c0, %c0_0] : memref<8x32xf32, #tpu.memory_space<vmem>>, vector<8x32xf32>
    %c0_1 = arith.constant 0 : index
    %c0_2 = arith.constant 0 : index
    %1 = vector.load %arg3[%c0_1, %c0_2] : memref<32x1xf32, #tpu.memory_space<vmem>>, vector<32x1xf32>
    %cst = arith.constant dense<0.000000e+00> : vector<8x1xf32>
    %2 = tpu.matmul %0, %1, %cst {dimension_numbers = #tpu.dot_dimension_numbers<[1], [0], [0], [1], [0, 0, 1, 1], [], []>} : vector<8x32xf32>, vector<32x1xf32>, vector<8x1xf32> -> vector<8x1xf32>
    %c0_3 = arith.constant 0 : index
    %c0_4 = arith.constant 0 : index
    %3 = vector.load %arg2[%c0_3, %c0_4] : memref<8x8xf32, #tpu.memory_space<vmem>>, vector<8x8xf32>
    %c0_5 = arith.constant 0 : index
    %c0_6 = arith.constant 0 : index
    %4 = vector.load %arg4[%c0_5, %c0_6] : memref<8x1xf32, #tpu.memory_space<vmem>>, vector<8x1xf32>
    %cst_7 = arith.constant dense<0.000000e+00> : vector<8x1xf32>
    %5 = tpu.matmul %3, %4, %cst_7 {dimension_numbers = #tpu.dot_dimension_numbers<[1], [0], [0], [1], [0, 0, 1, 1], [], []>} : vector<8x8xf32>, vector<8x1xf32>, vector<8x1xf32> -> vector<8x1xf32>
    %6 = arith.addf %2, %5 : vector<8x1xf32>
    %c0_8 = arith.constant 0 : index
    %7 = memref.load %arg5[%c0_8] : memref<1xf32, #tpu.memory_space<smem>>
    %8 = vector.broadcast %7 : f32 to vector<8x1xf32>
    %9 = arith.addf %6, %8 : vector<8x1xf32>
    %c0_9 = arith.constant 0 : index
    %c0_10 = arith.constant 0 : index
    %10 = vector.load %arg6[%c0_9, %c0_10] : memref<8x1xf32, #tpu.memory_space<vmem>>, vector<8x1xf32>
    tpu.vector_store %arg6[%c0_9, %c0_10], %9 {strides = array<i32>} : memref<8x1xf32, #tpu.memory_space<vmem>>, vector<8x1xf32>,
    return
  }
  func.func @transform_0(%arg0: i32) -> (i32, i32) {
    %c0_i32 = arith.constant 0 : i32
    %c0_i32_0 = arith.constant 0 : i32
    return %arg0, %c0_i32 : i32, i32
  }
  func.func @transform_1(%arg0: i32) -> (i32, i32) {
    %c0_i32 = arith.constant 0 : i32
    %c0_i32_0 = arith.constant 0 : i32
    return %arg0, %c0_i32 : i32, i32
  }
  func.func @transform_2(%arg0: i32) -> (i32, i32) {
    %c0_i32 = arith.constant 0 : i32
    %c0_i32_0 = arith.constant 0 : i32
    %c0_i32_1 = arith.constant 0 : i32
    return %c0_i32, %c0_i32_0 : i32, i32
  }
  func.func @transform_3(%arg0: i32) -> (i32, i32) {
    %c0_i32 = arith.constant 0 : i32
    %c0_i32_0 = arith.constant 0 : i32
    %c0_i32_1 = arith.constant 0 : i32
    return %c0_i32, %c0_i32_0 : i32, i32
  }
  func.func @transform_4(%arg0: i32) -> i32 {
    %c0_i32 = arith.constant 0 : i32
    %c0_i32_0 = arith.constant 0 : i32
    return %c0_i32 : i32
  }
  func.func @transform_5(%arg0: i32) -> (i32, i32) {
    %c0_i32 = arith.constant 0 : i32
    %c0_i32_0 = arith.constant 0 : i32
    return %arg0, %c0_i32 : i32, i32
  }
}

</mosaic_0001>

<llo_original>
// kernel: tpu_custom_call.1
$region0: #{tpu_custom_call.1}
  #allocation0 [shape = 'u32[]', space=smem, size = 0x4, offset = 0x4, fixed_abs, tag = 'smem constant byte address 0x4 - core index']
  #allocation1 [shape = 'u32[72,128]{1,0:T(1,128)}', space=vmem, size = 0x9000, scoped, tag = 'internal scratch']
  #allocation2 [shape = 'f32[1]{0:T(128)S(6)}', space=smem, size = 0x200, scoped, tag = 'scoped memory for tpu_custom_call.1']
  %s0 = inlined_call_operand.vmem [shape: f32[16,32], index: 0, kind: input, shape index: {}]
  %s1 = inlined_call_operand.vmem [shape: f32[16,8], index: 1, kind: input, shape index: {}]
  %s2 = inlined_call_operand.vmem [shape: f32[32,1], index: 2, kind: input, shape index: {}]
  %s3 = inlined_call_operand.vmem [shape: f32[8,1], index: 3, kind: input, shape index: {}]
  %s4 = inlined_call_operand.<no memory space> [shape: f32[1], index: 4, kind: input, shape index: {}]
  %s5 = inlined_call_operand.vmem [shape: f32[16,1], index: 5, kind: output, shape index: {}]
  %s6 = sld [smem:[#allocation0]]
  $region53: #{tpu_custom_call.1} parent=0
    _
  %s8 = ssub.s32 1, %s6
  %s9 = scalar_select 0, %s8, %s6
  %10 = sst [smem:[#allocation2]] %s4
  loop: start=0, step=1, limit=4
  $region2: #{tpu_custom_call.1} parent=0 // loop_pre_header
    _
  $region3: #{tpu_custom_call.1} parent=0 // loop_header
    %s12 = sphi 0, %s16
    %p13 = scmp.ge.s32.totalorder %s12, 4
    %s22 = sphi 0, %s24
    %s25 = sphi 0, %s22
    %s26 = sphi 0, %s25
    %s42 = sphi 0, %s26
    %s48 = sphi 0, %s50
    %s51 = sphi 0, %s48
    %s52 = sphi 0, %s51
    %s68 = sphi 0, %s52
    %s72 = sphi 0, %s72
    %s74 = sphi 0, %s72
    %s75 = sphi 0, %s74
    %s89 = sphi 0, %s75
    %s93 = sphi 0, %s93
    %s95 = sphi 0, %s93
    %s96 = sphi 0, %s95
    %s110 = sphi 0, %s96
    %s114 = sphi 0, %s114
    %s116 = sphi 0, %s114
    %s117 = sphi 0, %s116
    %s131 = sphi 0, %s117
    %s137 = sphi 0, %s139
    %s140 = sphi 0, %s137
    %s141 = sphi 0, %s140
    %s157 = sphi 0, %s141
  $region4: #{tpu_custom_call.1} parent=0 // loop_header_branch
    %15 = sbr.rel (%p13) target = $region8
  $region5: #{tpu_custom_call.1} parent=0 // loop_body
    %s17 = ssub.s32 %s12, 1
    %s18 = ssub.s32 %s12, 2
    %s19 = sadd.s32 %s12, 1
    %s20 = ssub.s32 %s12, %s19
    %p21 = scmp.eq.s32.totalorder %s20, 0
    %s23 = sadd.s32 %s22, 1
    %s24 = scalar_select %p21, %s22, %s23
    %p27 = pneg %p21
    %p28 = scmp.eq.s32.totalorder %s12, 1
    %p29 = por %p27, %p28
    %p30 = scmp.ne.s32.totalorder %s22, %s25
    %p31 = scmp.eq.s32.totalorder %s12, 0
    %p32 = por %p30, %p31
    %p33 = scmp.ne.s32.totalorder %s22, %s25
    %p34 = scmp.eq.s32.totalorder %s17, 1
    %p35 = por %p33, %p34
    %p36 = scmp.ne.s32.totalorder %s25, %s26
    %p37 = scmp.eq.s32.totalorder %s17, 0
    %p38 = por %p36, %p37
    %p39 = scmp.ne.s32.totalorder %s25, %s26
    %p40 = scmp.eq.s32.totalorder %s18, 1
    %p41 = por %p39, %p40
    %p43 = scmp.ne.s32.totalorder %s26, %s42
    %p44 = scmp.eq.s32.totalorder %s18, 0
    %p45 = por %p43, %p44
    %s46 = ssub.s32 %s12, %s19
    %p47 = scmp.eq.s32.totalorder %s46, 0
    %s49 = sadd.s32 %s48, 1
    %s50 = scalar_select %p47, %s48, %s49
    %p53 = pneg %p47
    %p54 = scmp.eq.s32.totalorder %s12, 1
    %p55 = por %p53, %p54
    %p56 = scmp.ne.s32.totalorder %s48, %s51
    %p57 = scmp.eq.s32.totalorder %s12, 0
    %p58 = por %p56, %p57
    %p59 = scmp.ne.s32.totalorder %s48, %s51
    %p60 = scmp.eq.s32.totalorder %s17, 1
    %p61 = por %p59, %p60
    %p62 = scmp.ne.s32.totalorder %s51, %s52
    %p63 = scmp.eq.s32.totalorder %s17, 0
    %p64 = por %p62, %p63
    %p65 = scmp.ne.s32.totalorder %s51, %s52
    %p66 = scmp.eq.s32.totalorder %s18, 1
    %p67 = por %p65, %p66
    %p69 = scmp.ne.s32.totalorder %s52, %s68
    %p70 = scmp.eq.s32.totalorder %s18, 0
    %p71 = por %p69, %p70
    %s73 = sadd.s32 %s72, 1
    %p76 = scmp.eq.s32.totalorder %s12, 1
    %p77 = scmp.ne.s32.totalorder %s72, %s74
    %p78 = scmp.eq.s32.totalorder %s12, 0
    %p79 = por %p77, %p78
    %p80 = scmp.ne.s32.totalorder %s72, %s74
    %p81 = scmp.eq.s32.totalorder %s17, 1
    %p82 = por %p80, %p81
    %p83 = scmp.ne.s32.totalorder %s74, %s75
    %p84 = scmp.eq.s32.totalorder %s17, 0
    %p85 = por %p83, %p84
    %p86 = scmp.ne.s32.totalorder %s74, %s75
    %p87 = scmp.eq.s32.totalorder %s18, 1
    %p88 = por %p86, %p87
    %p90 = scmp.ne.s32.totalorder %s75, %s89
    %p91 = scmp.eq.s32.totalorder %s18, 0
    %p92 = por %p90, %p91
    %s94 = sadd.s32 %s93, 1
    %p97 = scmp.eq.s32.totalorder %s12, 1
    %p98 = scmp.ne.s32.totalorder %s93, %s95
    %p99 = scmp.eq.s32.totalorder %s12, 0
    %p100 = por %p98, %p99
    %p101 = scmp.ne.s32.totalorder %s93, %s95
    %p102 = scmp.eq.s32.totalorder %s17, 1
    %p103 = por %p101, %p102
    %p104 = scmp.ne.s32.totalorder %s95, %s96
    %p105 = scmp.eq.s32.totalorder %s17, 0
    %p106 = por %p104, %p105
    %p107 = scmp.ne.s32.totalorder %s95, %s96
    %p108 = scmp.eq.s32.totalorder %s18, 1
    %p109 = por %p107, %p108
    %p111 = scmp.ne.s32.totalorder %s96, %s110
    %p112 = scmp.eq.s32.totalorder %s18, 0
    %p113 = por %p111, %p112
    %s115 = sadd.s32 %s114, 1
    %p118 = scmp.eq.s32.totalorder %s12, 1
    %p119 = scmp.ne.s32.totalorder %s114, %s116
    %p120 = scmp.eq.s32.totalorder %s12, 0
    %p121 = por %p119, %p120
    %p122 = scmp.ne.s32.totalorder %s114, %s116
    %p123 = scmp.eq.s32.totalorder %s17, 1
    %p124 = por %p122, %p123
    %p125 = scmp.ne.s32.totalorder %s116, %s117
    %p126 = scmp.eq.s32.totalorder %s17, 0
    %p127 = por %p125, %p126
    %p128 = scmp.ne.s32.totalorder %s116, %s117
    %p129 = scmp.eq.s32.totalorder %s18, 1
    %p130 = por %p128, %p129
    %p132 = scmp.ne.s32.totalorder %s117, %s131
    %p133 = scmp.eq.s32.totalorder %s18, 0
    %p134 = por %p132, %p133
    %s135 = ssub.s32 %s12, %s19
    %p136 = scmp.eq.s32.totalorder %s135, 0
    %s138 = sadd.s32 %s137, 1
    %s139 = scalar_select %p136, %s137, %s138
    %p142 = pneg %p136
    %p143 = scmp.eq.s32.totalorder %s12, 1
    %p144 = por %p142, %p143
    %p145 = scmp.ne.s32.totalorder %s137, %s140
    %p146 = scmp.eq.s32.totalorder %s12, 0
    %p147 = por %p145, %p146
    %p148 = scmp.ne.s32.totalorder %s137, %s140
    %p149 = scmp.eq.s32.totalorder %s17, 1
    %p150 = por %p148, %p149
    %p151 = scmp.ne.s32.totalorder %s140, %s141
    %p152 = scmp.eq.s32.totalorder %s17, 0
    %p153 = por %p151, %p152
    %p154 = scmp.ne.s32.totalorder %s140, %s141
    %p155 = scmp.eq.s32.totalorder %s18, 1
    %p156 = por %p154, %p155
    %p158 = scmp.ne.s32.totalorder %s141, %s157
    %p159 = scmp.eq.s32.totalorder %s18, 0
    %p160 = por %p158, %p159
    %p161 = scmp.le.s32.totalorder 1, %s12
    %p162 = scmp.lt.s32.totalorder %s12, 3
    %p163 = pnand %p161, %p162
    %p164 = pneg %p163
    // Predicated region
    $region9: #{tpu_custom_call.1} parent=5 // pred_check
      _
    $region10: #{tpu_custom_call.1} parent=5 // pred_check_branch
      %166 = sbr.rel (%p163) target = $region12
    $region11: #{tpu_custom_call.1} parent=5 // pred_region
      %s167 = ssub.s32 %s12, 1
      // Predicated region
      $region13: #{tpu_custom_call.1} parent=11 // pred_check
        %p168 = pneg %p85
      $region14: #{tpu_custom_call.1} parent=11 // pred_check_branch
        %170 = sbr.rel (%p168) target = $region16
      $region15: #{tpu_custom_call.1} parent=11 // pred_region
        _
      $region16: #{tpu_custom_call.1} parent=11 // pred_fallthru
        _
      // Predicated region
      $region17: #{tpu_custom_call.1} parent=11 // pred_check
        %p171 = pneg %p106
      $region18: #{tpu_custom_call.1} parent=11 // pred_check_branch
        %173 = sbr.rel (%p171) target = $region20
      $region19: #{tpu_custom_call.1} parent=11 // pred_region
        _
      $region20: #{tpu_custom_call.1} parent=11 // pred_fallthru
        _
      // Predicated region
      $region21: #{tpu_custom_call.1} parent=11 // pred_check
        %p174 = pneg %p127
      $region22: #{tpu_custom_call.1} parent=11 // pred_check_branch
        %176 = sbr.rel (%p174) target = $region24
      $region23: #{tpu_custom_call.1} parent=11 // pred_region
        _
      $region24: #{tpu_custom_call.1} parent=11 // pred_fallthru
        _
    $region12: #{tpu_custom_call.1} parent=5 // pred_fallthru
      _
    %p177 = scmp.lt.s32.totalorder %s12, 2
    // Predicated region
    $region25: #{tpu_custom_call.1} parent=5 // pred_check
      %p178 = pneg %p177
    $region26: #{tpu_custom_call.1} parent=5 // pred_check_branch
      %180 = sbr.rel (%p178) target = $region28
    $region27: #{tpu_custom_call.1} parent=5 // pred_region
      // Predicated region
      $region29: #{tpu_custom_call.1} parent=27 // pred_check
        %p181 = pneg %p32
      $region30: #{tpu_custom_call.1} parent=27 // pred_check_branch
        %183 = sbr.rel (%p181) target = $region32
      $region31: #{tpu_custom_call.1} parent=27 // pred_region
        %p184 = scmp.lt.s32.totalorder %s12, 1
        %s185 = scalar_select %p184, %s12, 1
        %s186 = smul.addr %s185, 8
        %s187 = scalar_lea.vmem %s0, %s186
      $region32: #{tpu_custom_call.1} parent=27 // pred_fallthru
        _
      // Predicated region
      $region33: #{tpu_custom_call.1} parent=27 // pred_check
        %p188 = pneg %p58
      $region34: #{tpu_custom_call.1} parent=27 // pred_check_branch
        %190 = sbr.rel (%p188) target = $region36
      $region35: #{tpu_custom_call.1} parent=27 // pred_region
        %p191 = scmp.lt.s32.totalorder %s12, 1
        %s192 = scalar_select %p191, %s12, 1
        %s193 = smul.addr %s192, 8
        %s194 = scalar_lea.vmem %s1, %s193
      $region36: #{tpu_custom_call.1} parent=27 // pred_fallthru
        _
    $region28: #{tpu_custom_call.1} parent=5 // pred_fallthru
      _
    %p195 = scmp.le.s32.totalorder 1, %s12
    %p196 = scmp.lt.s32.totalorder %s12, 3
    %p197 = pnand %p195, %p196
    %p198 = pneg %p197
    // Predicated region
    $region37: #{tpu_custom_call.1} parent=5 // pred_check
      _
    $region38: #{tpu_custom_call.1} parent=5 // pred_check_branch
      %200 = sbr.rel (%p197) target = $region40
    $region39: #{tpu_custom_call.1} parent=5 // pred_region
      %s201 = ssub.s32 %s12, 1
      %p202 = scmp.lt.s32.totalorder %s17, 1
      %s203 = scalar_select %p202, %s17, 1
      %s204 = smul.addr %s203, 8
      %s205 = scalar_lea.vmem %s0, %s204
      %p206 = pneg %p38
      %p207 = pneg %p35
      %p208 = scmp.lt.s32.totalorder %s17, 1
      %s209 = scalar_select %p208, %s17, 1
      %s210 = smul.addr %s209, 8
      %s211 = scalar_lea.vmem %s1, %s210
      %p212 = pneg %p64
      %p213 = pneg %p61
      %p214 = pneg %p85
      %p215 = pneg %p82
      %p216 = pneg %p106
      %p217 = pneg %p103
      %p218 = pneg %p127
      %p219 = pneg %p124
      %p220 = pneg %p153
      %p221 = pneg %p150
      %p222 = scmp.lt.s32.totalorder %s17, 1
      %s223 = scalar_select %p222, %s17, 1
      %s224 = smul.addr %s223, 8
      %s225 = scalar_lea.vmem %s5, %s224
      %p226 = scmp.lt.s32.totalorder %s17, 1
      %s227 = scalar_select %p226, %s17, 1
      %s228 = smul.addr %s227, 8
      %s229 = scalar_lea.vmem %s0, %s228
      %p230 = scmp.lt.s32.totalorder %s17, 1
      %s231 = scalar_select %p230, %s17, 1
      %s232 = smul.addr %s231, 8
      %s233 = scalar_lea.vmem %s1, %s232
      %p234 = scmp.lt.s32.totalorder %s17, 1
      %s235 = scalar_select %p234, %s17, 1
      %s236 = smul.addr %s235, 8
      %s237 = scalar_lea.vmem %s5, %s236
      %v238 = vld [vmem:[%s229] sm:$0xff]
      %v239 = vld [vmem:[%s2] sm:$0xff]
      %v240 = vld [vmem:[%s2 + $0x8] sm:$0xff]
      %v241 = vld [vmem:[%s2 + $0x10] sm:$0xff]
      %v242 = vld [vmem:[%s2 + $0x18] sm:$0xff]
      %v243 = vld [vmem:[%s233] sm:$0xff]
      %v244 = vld [vmem:[%s3] sm:$0xff]
      %vm245 = vcmask 64512
      %v247 = vsel %vm245, %v243, 0
      %249 = vmatpush.msra.mxu0 0.0
      %250 = vmatpush.msra.mxu0 0.0
      %251 = vmatpush.msra.mxu0 0.0
      %252 = vmatpush.msra.mxu0 0.0
      %253 = vmatpush.msra.mxu0 0.0
      %254 = vmatpush.msra.mxu0 0.0
      %255 = vmatpush.msra.mxu0 0.0
      %256 = vmatpush.msra.mxu0 0.0
      %257 = vmatpush.msra.mxu0 0.0
      %258 = vmatpush.msra.mxu0 0.0
      %259 = vmatpush.msra.mxu0 0.0
      %260 = vmatpush.msra.mxu0 0.0
      %261 = vmatpush.msra.mxu0 0.0
      %262 = vmatpush.msra.mxu0 0.0
      %263 = vmatpush.msra.mxu0 0.0
      %264 = vmatpush.msra.mxu0 %v244
      %265 = vmatmul.f32.gmra.mxu0 %v247
      %v266 = vpop.f32.mrf.mxu0
      %v267 = vadd.f32 0.0, %v266
      %268 = vdwg.mxu0
      %vm269 = vcmask 261120
      %v271 = vsel %vm269, %v238, 0
      %273 = vmatpush.msra.mxu0 0.0
      %274 = vmatpush.msra.mxu0 0.0
      %275 = vmatpush.msra.mxu0 0.0
      %276 = vmatpush.msra.mxu0 0.0
      %277 = vmatpush.msra.mxu0 0.0
      %278 = vmatpush.msra.mxu0 0.0
      %279 = vmatpush.msra.mxu0 0.0
      %280 = vmatpush.msra.mxu0 0.0
      %281 = vmatpush.msra.mxu0 0.0
      %282 = vmatpush.msra.mxu0 0.0
      %283 = vmatpush.msra.mxu0 0.0
      %284 = vmatpush.msra.mxu0 0.0
      %285 = vmatpush.msra.mxu0 %v242
      %286 = vmatpush.msra.mxu0 %v241
      %287 = vmatpush.msra.mxu0 %v240
      %288 = vmatpush.msra.mxu0 %v239
      %289 = vmatmul.f32.gmra.mxu0 %v271
      %v290 = vpop.f32.mrf.mxu0
      %v291 = vadd.f32 %v267, %v290
      %292 = vdwg.mxu0
      %s293 = sld [smem:[#allocation2]]
      %v294 = vstv %s293
      %v295 = vadd.f32 %v291, %v294
      %vm296 = vcmask 7168
      %297 = vst.msk [vmem:[%s237] sm:$0xff] %vm296, %v295
      %p298 = scmp.lt.s32.totalorder %s17, 1
      %s299 = scalar_select %p298, %s17, 1
      %s300 = smul.addr %s299, 8
      %s301 = scalar_lea.vmem %s5, %s300
      // Predicated region
      $region41: #{tpu_custom_call.1} parent=39 // pred_check
        %p302 = pneg %p150
      $region42: #{tpu_custom_call.1} parent=39 // pred_check_branch
        %304 = sbr.rel (%p302) target = $region44
      $region43: #{tpu_custom_call.1} parent=39 // pred_region
        _
      $region44: #{tpu_custom_call.1} parent=39 // pred_fallthru
        _
    $region40: #{tpu_custom_call.1} parent=5 // pred_fallthru
      _
    %p305 = scmp.le.s32.totalorder 2, %s12
    // Predicated region
    $region45: #{tpu_custom_call.1} parent=5 // pred_check
      %p306 = pneg %p305
    $region46: #{tpu_custom_call.1} parent=5 // pred_check_branch
      %308 = sbr.rel (%p306) target = $region48
    $region47: #{tpu_custom_call.1} parent=5 // pred_region
      %s309 = ssub.s32 %s12, 2
      // Predicated region
      $region49: #{tpu_custom_call.1} parent=47 // pred_check
        %p310 = pneg %p156
      $region50: #{tpu_custom_call.1} parent=47 // pred_check_branch
        %312 = sbr.rel (%p310) target = $region52
      $region51: #{tpu_custom_call.1} parent=47 // pred_region
        %p313 = scmp.lt.s32.totalorder %s18, 1
        %s314 = scalar_select %p313, %s18, 1
        %s315 = smul.addr %s314, 8
        %s316 = scalar_lea.vmem %s5, %s315
      $region52: #{tpu_custom_call.1} parent=47 // pred_fallthru
        _
    $region48: #{tpu_custom_call.1} parent=5 // pred_fallthru
      _
  $region6: #{tpu_custom_call.1} parent=0 // loop_footer
    %s16 = sadd.s32 1, %s12
  $region7: #{tpu_custom_call.1} parent=0 // loop_footer_branch
    %11 = sbr.rel target = $region3
  $region8: #{tpu_custom_call.1} parent=0 // loop_exit
    _

</llo_original>
